<compile_context>
chip_gen: v7x
topology: tpu7x:2x2x1
jax: 0.10.0
libtpu: 0.0.40
codegen_flags: <defaults>
</compile_context>

<pallas_src>
import jax
import jax.numpy as jnp
from jax.experimental import pallas as pl
from jax.experimental.pallas import tpu as pltpu  # noqa: F401  (TPU backend)

# Small, module-consistent sizes.
B = 2            # batch
C_IN = 3         # RGB input channels
H = W = 16       # spatial
FEAT = 32        # stand-in for resnet.fc.in_features (2048 in real resnet50)
EMBED = 16       # embed_size
EPS = 1e-5       # BatchNorm1d eps (PyTorch default)

K_RAW = 9 * C_IN          # im2col contraction dim (27)
KP = 32                   # zero-padded contraction dim (lane-friendlier)
HW = H * W                # spatial positions per image
ROWS = B * HW             # im2col rows (512)

# Packed-param slab row layout (one (8,128) f32 array, rows 4..7 are zero pad):
_ROW_CONV_B = 0           # lanes [0, FEAT)
_ROW_LIN_B = 1            # lanes [0, EMBED)
_ROW_GAMMA = 2            # lanes [0, EMBED)
_ROW_BETA = 3             # lanes [0, EMBED)


# ---------------------------------------------------------------------------
# Single fused kernel: im2col-conv + ReLU + GAP + Linear + BatchNorm1d(train).
# One invocation over the whole batch (no grid) so BN batch statistics are
# computed in-kernel.
# ---------------------------------------------------------------------------
def encoder_kernel(p_ref, cw_ref, lw_ref, pk_ref, o_ref):
    # p_ref:  (ROWS, KP)    bf16 im2col patches (zero-padded K)
    # cw_ref: (KP, FEAT)    bf16 conv weights flattened+padded to match
    # lw_ref: (FEAT, EMBED) bf16 linear weight (stored transposed)
    # pk_ref: (8, 128)      f32 packed small params (cb / lb / gamma / beta rows)
    # o_ref:  (B, EMBED)    f32 output

    # Unpack the tiny per-channel params from the single packed slab
    # (static, lane-offset-0 slices -> no relayout).
    pk = pk_ref[...]
    cb = pk[_ROW_CONV_B:_ROW_CONV_B + 1, 0:FEAT]      # (1, FEAT)
    lb = pk[_ROW_LIN_B:_ROW_LIN_B + 1, 0:EMBED]       # (1, EMBED)
    gamma = pk[_ROW_GAMMA:_ROW_GAMMA + 1, 0:EMBED]    # (1, EMBED)
    beta = pk[_ROW_BETA:_ROW_BETA + 1, 0:EMBED]       # (1, EMBED)

    # 3x3 conv as a single MXU matmul over im2col patches (bf16 operands,
    # f32 accumulate), bias + ReLU in f32.
    y = jnp.maximum(
        jnp.dot(p_ref[...], cw_ref[...], preferred_element_type=jnp.float32)
        + cb, 0.0)                                     # (ROWS, FEAT) f32

    # AdaptiveAvgPool2d((1,1)) == per-image spatial mean.  Done as two static
    # sublane-slice reductions (VPU/XLU), off the MXU and with no pool-matrix
    # input DMA.
    pooled = jnp.concatenate(
        [jnp.sum(y[b * HW:(b + 1) * HW, :], axis=0, keepdims=True)
         for b in range(B)], axis=0) * jnp.float32(1.0 / HW)   # (B, FEAT) f32

    # Linear(FEAT -> EMBED): bf16 MXU operands, f32 accumulate + bias.
    z = jnp.dot(pooled.astype(jnp.bfloat16), lw_ref[...],
                preferred_element_type=jnp.float32) + lb        # (B, EMBED) f32

    # BatchNorm1d in training mode: batch mean + biased variance (f32).
    mean = jnp.mean(z, axis=0, keepdims=True)
    var = jnp.mean((z - mean) ** 2, axis=0, keepdims=True)
    # NOTE: output lane width EMBED=16 (<128) lowers to a single masked store;
    # negligible for a 128-byte output.  At real embed sizes keep EMBED % 128
    # == 0 (or write a lane-dense padded slab and slice in the wrapper).
    o_ref[...] = (gamma * (z - mean) * jax.lax.rsqrt(var + EPS) + beta)


# ---------------------------------------------------------------------------
# Wrapper: im2col + param packing done once outside the kernel; one pallas_call.
# ---------------------------------------------------------------------------
def _im2col(images_nchw):
    # images_nchw: [B, C_IN, H, W] float32 (PyTorch layout)
    x = jnp.transpose(images_nchw, (0, 2, 3, 1))               # NHWC
    xp = jnp.pad(x, ((0, 0), (1, 1), (1, 1), (0, 0)))          # pad=1
    taps = []
    for dy in range(3):                                        # static 3x3 taps
        for dx in range(3):
            taps.append(xp[:, dy:dy + H, dx:dx + W, :])        # [B, H, W, C_IN]
    p = jnp.concatenate(taps, axis=-1)                         # [B, H, W, 9*C_IN]
    p = p.reshape(ROWS, K_RAW)
    return jnp.pad(p, ((0, 0), (0, KP - K_RAW)))               # [ROWS, KP]


def _pack_small_params(params):
    # One (8,128)-padded f32 slab: 4 tiny per-channel vectors -> 1 DMA.
    packed = jnp.zeros((8, 128), jnp.float32)
    packed = packed.at[_ROW_CONV_B, :FEAT].set(params["conv_b"][0])
    packed = packed.at[_ROW_LIN_B, :EMBED].set(params["lin_b"][0])
    packed = packed.at[_ROW_GAMMA, :EMBED].set(params["bn_gamma"][0])
    packed = packed.at[_ROW_BETA, :EMBED].set(params["bn_beta"][0])
    return packed


def encoder_cnn_forward(images_nchw, params):
    # bf16 MXU operands (f32 accumulate inside the kernel).
    patches = _im2col(images_nchw).astype(jnp.bfloat16)          # (ROWS, KP)

    # Conv weight (3,3,C_IN,FEAT) -> (9*C_IN, FEAT), ordering matches the
    # (dy, dx, c) concat order of _im2col; zero-pad K rows to KP.
    # NOTE: a real PyTorch OIHW checkpoint (FEAT,C_IN,3,3) would need a
    # transpose to (3,3,C_IN,FEAT) before this reshape.
    cw = params["conv_w"].reshape(K_RAW, FEAT)
    cw = jnp.pad(cw, ((0, KP - K_RAW), (0, 0))).astype(jnp.bfloat16)
    lw = params["lin_w"].astype(jnp.bfloat16)                    # (FEAT, EMBED)
    packed = _pack_small_params(params)                          # (8, 128) f32

    flops = 2 * ROWS * KP * FEAT + ROWS * FEAT + 2 * B * FEAT * EMBED
    bytes_accessed = (patches.size * 2 + cw.size * 2 + lw.size * 2
                      + packed.size * 4 + B * EMBED * 4)

    return pl.pallas_call(
        encoder_kernel,
        out_shape=jax.ShapeDtypeStruct((B, EMBED), jnp.float32),
        cost_estimate=pl.CostEstimate(flops=flops,
                                      transcendentals=EMBED,      # rsqrt lanes
                                      bytes_accessed=bytes_accessed),
    )(patches, cw, lw, packed)


def init_params(key):
    k0, k1, k2, k3 = jax.random.split(key, 4)
    conv_w = 0.1 * jax.random.normal(k0, (3, 3, C_IN, FEAT), jnp.float32)
    conv_b = 0.1 * jax.random.normal(k1, (1, FEAT), jnp.float32)
    # nn.Linear(FEAT, EMBED); stored as [FEAT, EMBED] (transposed PyTorch layout)
    lin_w = 0.1 * jax.random.normal(k2, (FEAT, EMBED), jnp.float32)
    lin_b = 0.1 * jax.random.normal(k3, (1, EMBED), jnp.float32)
    # BatchNorm1d defaults: weight=1, bias=0
    bn_gamma = jnp.ones((1, EMBED), jnp.float32)
    bn_beta = jnp.zeros((1, EMBED), jnp.float32)
    return dict(conv_w=conv_w, conv_b=conv_b, lin_w=lin_w, lin_b=lin_b,
                bn_gamma=bn_gamma, bn_beta=bn_beta)


if __name__ == "__main__":
    key = jax.random.PRNGKey(0)
    k_img, k_par = jax.random.split(key)
    images = jax.random.normal(k_img, (B, C_IN, H, W), jnp.float32)  # NCHW
    params = init_params(k_par)

    out = jax.jit(encoder_cnn_forward)(images, params)
    out = jax.block_until_ready(out)

    assert out.shape == (B, EMBED), out.shape
    assert bool(jnp.all(jnp.isfinite(out)))
    print("KERNEL_OK")
</pallas_src>

<mosaic_0001>
module attributes {stable_mosaic.version = 11 : i64} {
  func.func @encoder_kernel(%arg0: memref<512x32xbf16, #tpu.memory_space<vmem>>, %arg1: memref<32x32xbf16, #tpu.memory_space<vmem>>, %arg2: memref<32x16xbf16, #tpu.memory_space<vmem>>, %arg3: memref<8x128xf32, #tpu.memory_space<vmem>>, %arg4: memref<2x16xf32, #tpu.memory_space<vmem>>) attributes {dimension_semantics = [], scalar_prefetch = 0 : i64, scratch_operands = 0 : i64, tpu.core_type = #tpu.core_type<tc>} {
    %c0 = arith.constant 0 : index
    %c0_0 = arith.constant 0 : index
    %0 = vector.load %arg3[%c0, %c0_0] : memref<8x128xf32, #tpu.memory_space<vmem>>, vector<8x128xf32>
    %1 = vector.extract_strided_slice %0 {offsets = [0, 0], sizes = [1, 32], strides = [1, 1]} : vector<8x128xf32> to vector<1x32xf32>
    %2 = vector.extract_strided_slice %0 {offsets = [1, 0], sizes = [1, 16], strides = [1, 1]} : vector<8x128xf32> to vector<1x16xf32>
    %3 = vector.extract_strided_slice %0 {offsets = [2, 0], sizes = [1, 16], strides = [1, 1]} : vector<8x128xf32> to vector<1x16xf32>
    %4 = vector.extract_strided_slice %0 {offsets = [3, 0], sizes = [1, 16], strides = [1, 1]} : vector<8x128xf32> to vector<1x16xf32>
    %c0_1 = arith.constant 0 : index
    %c0_2 = arith.constant 0 : index
    %5 = vector.load %arg0[%c0_1, %c0_2] : memref<512x32xbf16, #tpu.memory_space<vmem>>, vector<512x32xbf16>
    %c0_3 = arith.constant 0 : index
    %c0_4 = arith.constant 0 : index
    %6 = vector.load %arg1[%c0_3, %c0_4] : memref<32x32xbf16, #tpu.memory_space<vmem>>, vector<32x32xbf16>
    %cst = arith.constant dense<0.000000e+00> : vector<512x32xf32>
    %7 = tpu.matmul %5, %6, %cst {dimension_numbers = #tpu.dot_dimension_numbers<[1], [0], [0], [1], [0, 0, 1, 1], [], []>} : vector<512x32xbf16>, vector<32x32xbf16>, vector<512x32xf32> -> vector<512x32xf32>
    %8 = vector.broadcast %1 : vector<1x32xf32> to vector<512x32xf32>
    %9 = arith.addf %7, %8 : vector<512x32xf32>
    %cst_5 = arith.constant 0.000000e+00 : f32
    %10 = vector.broadcast %cst_5 : f32 to vector<512x32xf32>
    %11 = arith.maximumf %9, %10 : vector<512x32xf32>
    %12 = vector.extract_strided_slice %11 {offsets = [0, 0], sizes = [256, 32], strides = [1, 1]} : vector<512x32xf32> to vector<256x32xf32>
    %cst_6 = arith.constant dense<0.000000e+00> : vector<32xf32>
    %13 = vector.multi_reduction <add>, %12, %cst_6 [0] : vector<256x32xf32> to vector<32xf32>
    %14 = vector.shape_cast %13 : vector<32xf32> to vector<1x32xf32>
    %15 = vector.extract_strided_slice %11 {offsets = [256, 0], sizes = [256, 32], strides = [1, 1]} : vector<512x32xf32> to vector<256x32xf32>
    %cst_7 = arith.constant dense<0.000000e+00> : vector<32xf32>
    %16 = vector.multi_reduction <add>, %15, %cst_7 [0] : vector<256x32xf32> to vector<32xf32>
    %17 = vector.shape_cast %16 : vector<32xf32> to vector<1x32xf32>
    %18 = tpu.concatenate %14, %17 in 0 : vector<1x32xf32>, vector<1x32xf32> -> vector<2x32xf32>
    %cst_8 = arith.constant 3.906250e-03 : f32
    %19 = vector.broadcast %cst_8 : f32 to vector<2x32xf32>
    %20 = arith.mulf %18, %19 : vector<2x32xf32>
    %21 = arith.truncf %20 : vector<2x32xf32> to vector<2x32xbf16>
    %c0_9 = arith.constant 0 : index
    %c0_10 = arith.constant 0 : index
    %22 = vector.load %arg2[%c0_9, %c0_10] : memref<32x16xbf16, #tpu.memory_space<vmem>>, vector<32x16xbf16>
    %cst_11 = arith.constant dense<0.000000e+00> : vector<2x16xf32>
    %23 = tpu.matmul %21, %22, %cst_11 {dimension_numbers = #tpu.dot_dimension_numbers<[1], [0], [0], [1], [0, 0, 1, 1], [], []>} : vector<2x32xbf16>, vector<32x16xbf16>, vector<2x16xf32> -> vector<2x16xf32>
    %24 = vector.broadcast %2 : vector<1x16xf32> to vector<2x16xf32>
    %25 = arith.addf %23, %24 : vector<2x16xf32>
    %cst_12 = arith.constant dense<0.000000e+00> : vector<16xf32>
    %26 = vector.multi_reduction <add>, %25, %cst_12 [0] : vector<2x16xf32> to vector<16xf32>
    %27 = vector.shape_cast %26 : vector<16xf32> to vector<1x16xf32>
    %cst_13 = arith.constant 2.000000e+00 : f32
    %28 = vector.broadcast %cst_13 : f32 to vector<1x16xf32>
    %29 = arith.divf %27, %28 : vector<1x16xf32>
    %30 = vector.broadcast %29 : vector<1x16xf32> to vector<2x16xf32>
    %31 = arith.subf %25, %30 : vector<2x16xf32>
    %32 = arith.mulf %31, %31 : vector<2x16xf32>
    %cst_14 = arith.constant dense<0.000000e+00> : vector<16xf32>
    %33 = vector.multi_reduction <add>, %32, %cst_14 [0] : vector<2x16xf32> to vector<16xf32>
    %34 = vector.shape_cast %33 : vector<16xf32> to vector<1x16xf32>
    %cst_15 = arith.constant 2.000000e+00 : f32
    %35 = vector.broadcast %cst_15 : f32 to vector<1x16xf32>
    %36 = arith.divf %34, %35 : vector<1x16xf32>
    %37 = vector.broadcast %29 : vector<1x16xf32> to vector<2x16xf32>
    %38 = arith.subf %25, %37 : vector<2x16xf32>
    %39 = vector.broadcast %3 : vector<1x16xf32> to vector<2x16xf32>
    %40 = arith.mulf %39, %38 : vector<2x16xf32>
    %cst_16 = arith.constant 9.99999974E-6 : f32
    %41 = vector.broadcast %cst_16 : f32 to vector<1x16xf32>
    %42 = arith.addf %36, %41 : vector<1x16xf32>
    %43 = math.rsqrt %42 : vector<1x16xf32>
    %44 = vector.broadcast %43 : vector<1x16xf32> to vector<2x16xf32>
    %45 = arith.mulf %40, %44 : vector<2x16xf32>
    %46 = vector.broadcast %4 : vector<1x16xf32> to vector<2x16xf32>
    %47 = arith.addf %45, %46 : vector<2x16xf32>
    %c0_17 = arith.constant 0 : index
    %c0_18 = arith.constant 0 : index
    %48 = vector.load %arg4[%c0_17, %c0_18] : memref<2x16xf32, #tpu.memory_space<vmem>>, vector<2x16xf32>
    tpu.vector_store %arg4[%c0_17, %c0_18], %47 {strides = array<i32>} : memref<2x16xf32, #tpu.memory_space<vmem>>, vector<2x16xf32>,
    return
  }
}

</mosaic_0001>

<llo_original>
// kernel: encoder_cnn_forward.1
$region0: #{encoder_cnn_forward.1}
  #allocation0 [shape = 'u32[]', space=smem, size = 0x4, offset = 0x4, fixed_abs, tag = 'smem constant byte address 0x4 - core index']
  #allocation1 [shape = 'u32[144,128]{1,0:T(1,128)}', space=vmem, size = 0x12000, scoped, tag = 'internal scratch']
  %s0 = inlined_call_operand.vmem [shape: bf16[512,32], index: 0, kind: input, shape index: {}]
  %s1 = inlined_call_operand.vmem [shape: bf16[32,32], index: 1, kind: input, shape index: {}]
  %s2 = inlined_call_operand.vmem [shape: bf16[32,16], index: 2, kind: input, shape index: {}]
  %s3 = inlined_call_operand.vmem [shape: f32[8,128], index: 3, kind: input, shape index: {}]
  %s4 = inlined_call_operand.hbm [shape: f32[2,16], index: 4, kind: output, shape index: {}]
  %s5 = sld [smem:[#allocation0]]
  $region26: #{encoder_cnn_forward.1} parent=0
    _
  %s7 = ssub.s32 1, %s5
  %s8 = scalar_select 0, %s7, %s5
  $region1: #{encoder_cnn_forward.1} parent=0
    #allocation2 [shape = 'u8[1024]{0}', space=vmem, size = 0x400, scoped, tag = 'output window, operand 0, single buffered']
    #allocation3 [shape = 's32[1]{0}', space=sflag, size = 0x4, scoped, tag = 'scoped memory for encoder_cnn_forward.1']
    %9 = vsyncpa [#allocation3], 0
    // Predicated region
    $region2: #{encoder_cnn_forward.1} parent=1 // pred_check
      _
    $region3: #{encoder_cnn_forward.1} parent=1 // pred_check_branch
      %11 = sbr.rel (0) target = $region5
    $region4: #{encoder_cnn_forward.1} parent=1 // pred_region
      _
    $region5: #{encoder_cnn_forward.1} parent=1 // pred_fallthru
      _
    // Predicated region
    $region6: #{encoder_cnn_forward.1} parent=1 // pred_check
      _
    $region7: #{encoder_cnn_forward.1} parent=1 // pred_check_branch
      %13 = sbr.rel (0) target = $region9
    $region8: #{encoder_cnn_forward.1} parent=1 // pred_region
      _
    $region9: #{encoder_cnn_forward.1} parent=1 // pred_fallthru
      _
    // Predicated region
    $region10: #{encoder_cnn_forward.1} parent=1 // pred_check
      _
    $region11: #{encoder_cnn_forward.1} parent=1 // pred_check_branch
      %15 = sbr.rel (0) target = $region13
    $region12: #{encoder_cnn_forward.1} parent=1 // pred_region
      _
    $region13: #{encoder_cnn_forward.1} parent=1 // pred_fallthru
      _
    // Predicated region
    $region14: #{encoder_cnn_forward.1} parent=1 // pred_check
      _
    $region15: #{encoder_cnn_forward.1} parent=1 // pred_check_branch
      %17 = sbr.rel (0) target = $region17
    $region16: #{encoder_cnn_forward.1} parent=1 // pred_region
      _
    $region17: #{encoder_cnn_forward.1} parent=1 // pred_fallthru
      _
    %v19 = vld [vmem:[%s3] sm:$0xff]
    %v20 = vld [vmem:[%s0] sm:$0xf]
    %v21 = vld [vmem:[%s0 + $0x4] sm:$0xf]
    %v22 = vld [vmem:[%s0 + $0x8] sm:$0xf]
    %v23 = vld [vmem:[%s0 + $0xc] sm:$0xf]
    %v24 = vld [vmem:[%s0 + $0x10] sm:$0xf]
    %v25 = vld [vmem:[%s0 + $0x14] sm:$0xf]
    %v26 = vld [vmem:[%s0 + $0x18] sm:$0xf]
    %v27 = vld [vmem:[%s0 + $0x1c] sm:$0xf]
    %v28 = vld [vmem:[%s0 + $0x20] sm:$0xf]
    %v29 = vld [vmem:[%s0 + $0x24] sm:$0xf]
    %v30 = vld [vmem:[%s0 + $0x28] sm:$0xf]
    %v31 = vld [vmem:[%s0 + $0x2c] sm:$0xf]
    %v32 = vld [vmem:[%s0 + $0x30] sm:$0xf]
    %v33 = vld [vmem:[%s0 + $0x34] sm:$0xf]
    %v34 = vld [vmem:[%s0 + $0x38] sm:$0xf]
    %v35 = vld [vmem:[%s0 + $0x3c] sm:$0xf]
    %v36 = vld [vmem:[%s0 + $0x40] sm:$0xf]
    %v37 = vld [vmem:[%s0 + $0x44] sm:$0xf]
    %v38 = vld [vmem:[%s0 + $0x48] sm:$0xf]
    %v39 = vld [vmem:[%s0 + $0x4c] sm:$0xf]
    %v40 = vld [vmem:[%s0 + $0x50] sm:$0xf]
    %v41 = vld [vmem:[%s0 + $0x54] sm:$0xf]
    %v42 = vld [vmem:[%s0 + $0x58] sm:$0xf]
    %v43 = vld [vmem:[%s0 + $0x5c] sm:$0xf]
    %v44 = vld [vmem:[%s0 + $0x60] sm:$0xf]
    %v45 = vld [vmem:[%s0 + $0x64] sm:$0xf]
    %v46 = vld [vmem:[%s0 + $0x68] sm:$0xf]
    %v47 = vld [vmem:[%s0 + $0x6c] sm:$0xf]
    %v48 = vld [vmem:[%s0 + $0x70] sm:$0xf]
    %v49 = vld [vmem:[%s0 + $0x74] sm:$0xf]
    %v50 = vld [vmem:[%s0 + $0x78] sm:$0xf]
    %v51 = vld [vmem:[%s0 + $0x7c] sm:$0xf]
    %v52 = vld [vmem:[%s0 + $0x80] sm:$0xf]
    %v53 = vld [vmem:[%s0 + $0x84] sm:$0xf]
    %v54 = vld [vmem:[%s0 + $0x88] sm:$0xf]
    %v55 = vld [vmem:[%s0 + $0x8c] sm:$0xf]
    %v56 = vld [vmem:[%s0 + $0x90] sm:$0xf]
    %v57 = vld [vmem:[%s0 + $0x94] sm:$0xf]
    %v58 = vld [vmem:[%s0 + $0x98] sm:$0xf]
    %v59 = vld [vmem:[%s0 + $0x9c] sm:$0xf]
    %v60 = vld [vmem:[%s0 + $0xa0] sm:$0xf]
    %v61 = vld [vmem:[%s0 + $0xa4] sm:$0xf]
    %v62 = vld [vmem:[%s0 + $0xa8] sm:$0xf]
    %v63 = vld [vmem:[%s0 + $0xac] sm:$0xf]
    %v64 = vld [vmem:[%s0 + $0xb0] sm:$0xf]
    %v65 = vld [vmem:[%s0 + $0xb4] sm:$0xf]
    %v66 = vld [vmem:[%s0 + $0xb8] sm:$0xf]
    %v67 = vld [vmem:[%s0 + $0xbc] sm:$0xf]
    %v68 = vld [vmem:[%s0 + $0xc0] sm:$0xf]
    %v69 = vld [vmem:[%s0 + $0xc4] sm:$0xf]
    %v70 = vld [vmem:[%s0 + $0xc8] sm:$0xf]
    %v71 = vld [vmem:[%s0 + $0xcc] sm:$0xf]
    %v72 = vld [vmem:[%s0 + $0xd0] sm:$0xf]
    %v73 = vld [vmem:[%s0 + $0xd4] sm:$0xf]
    %v74 = vld [vmem:[%s0 + $0xd8] sm:$0xf]
    %v75 = vld [vmem:[%s0 + $0xdc] sm:$0xf]
    %v76 = vld [vmem:[%s0 + $0xe0] sm:$0xf]
    %v77 = vld [vmem:[%s0 + $0xe4] sm:$0xf]
    %v78 = vld [vmem:[%s0 + $0xe8] sm:$0xf]
    %v79 = vld [vmem:[%s0 + $0xec] sm:$0xf]
    %v80 = vld [vmem:[%s0 + $0xf0] sm:$0xf]
    %v81 = vld [vmem:[%s0 + $0xf4] sm:$0xf]
    %v82 = vld [vmem:[%s0 + $0xf8] sm:$0xf]
    %v83 = vld [vmem:[%s0 + $0xfc] sm:$0xf]
    %v84 = vld [vmem:[%s1] sm:$0xf]
    %v85 = vld [vmem:[%s1 + $0x4] sm:$0xf]
    %v86 = vld [vmem:[%s1 + $0x8] sm:$0xf]
    %v87 = vld [vmem:[%s1 + $0xc] sm:$0xf]
    %v88 = vlaneseq
    %v89 = vshrl.u32 %v88, 7
    %v90 = vsub.s32 0, %v89
    %v91 = vrot.slane %v19, %v90
    %v156 = vunpack.c.l.b16 %v20
    %v157 = vunpack.c.l.b16 %v21
    %v158 = vunpack.c.l.b16 %v22
    %v159 = vunpack.c.l.b16 %v23
    %v160 = vunpack.c.l.b16 %v24
    %v161 = vunpack.c.l.b16 %v25
    %v162 = vunpack.c.l.b16 %v26
    %v163 = vunpack.c.l.b16 %v27
    %v164 = vunpack.c.l.b16 %v28
    %v165 = vunpack.c.l.b16 %v29
    %v166 = vunpack.c.l.b16 %v30
    %v167 = vunpack.c.l.b16 %v31
    %v168 = vunpack.c.l.b16 %v32
    %v169 = vunpack.c.l.b16 %v33
    %v170 = vunpack.c.l.b16 %v34
    %v171 = vunpack.c.l.b16 %v35
    %v172 = vunpack.c.l.b16 %v36
    %v173 = vunpack.c.l.b16 %v37
    %v174 = vunpack.c.l.b16 %v38
    %v175 = vunpack.c.l.b16 %v39
    %v176 = vunpack.c.l.b16 %v40
    %v177 = vunpack.c.l.b16 %v41
    %v178 = vunpack.c.l.b16 %v42
    %v179 = vunpack.c.l.b16 %v43
    %v180 = vunpack.c.l.b16 %v44
    %v181 = vunpack.c.l.b16 %v45
    %v182 = vunpack.c.l.b16 %v46
    %v183 = vunpack.c.l.b16 %v47
    %v184 = vunpack.c.l.b16 %v48
    %v185 = vunpack.c.l.b16 %v49
    %v186 = vunpack.c.l.b16 %v50
    %v187 = vunpack.c.l.b16 %v51
    %v188 = vunpack.c.l.b16 %v52
    %v189 = vunpack.c.l.b16 %v53
    %v190 = vunpack.c.l.b16 %v54
    %v191 = vunpack.c.l.b16 %v55
    %v192 = vunpack.c.l.b16 %v56
    %v193 = vunpack.c.l.b16 %v57
    %v194 = vunpack.c.l.b16 %v58
    %v195 = vunpack.c.l.b16 %v59
    %v196 = vunpack.c.l.b16 %v60
    %v197 = vunpack.c.l.b16 %v61
    %v198 = vunpack.c.l.b16 %v62
    %v199 = vunpack.c.l.b16 %v63
    %v200 = vunpack.c.l.b16 %v64
    %v201 = vunpack.c.l.b16 %v65
    %v202 = vunpack.c.l.b16 %v66
    %v203 = vunpack.c.l.b16 %v67
    %v204 = vunpack.c.l.b16 %v68
    %v205 = vunpack.c.l.b16 %v69
    %v206 = vunpack.c.l.b16 %v70
    %v207 = vunpack.c.l.b16 %v71
    %v208 = vunpack.c.l.b16 %v72
    %v209 = vunpack.c.l.b16 %v73
    %v210 = vunpack.c.l.b16 %v74
    %v211 = vunpack.c.l.b16 %v75
    %v212 = vunpack.c.l.b16 %v76
    %v213 = vunpack.c.l.b16 %v77
    %v214 = vunpack.c.l.b16 %v78
    %v215 = vunpack.c.l.b16 %v79
    %v216 = vunpack.c.l.b16 %v80
    %v217 = vunpack.c.l.b16 %v81
    %v218 = vunpack.c.l.b16 %v82
    %v219 = vunpack.c.l.b16 %v83
    %v220 = vpack.c.b16 %v157, %v156
    %v221 = vpack.c.b16 %v159, %v158
    %v222 = vpack.c.b16 %v161, %v160
    %v223 = vpack.c.b16 %v163, %v162
    %v224 = vpack.c.b16 %v165, %v164
    %v225 = vpack.c.b16 %v167, %v166
    %v226 = vpack.c.b16 %v169, %v168
    %v227 = vpack.c.b16 %v171, %v170
    %v228 = vpack.c.b16 %v173, %v172
    %v229 = vpack.c.b16 %v175, %v174
    %v230 = vpack.c.b16 %v177, %v176
    %v231 = vpack.c.b16 %v179, %v178
    %v232 = vpack.c.b16 %v181, %v180
    %v233 = vpack.c.b16 %v183, %v182
    %v234 = vpack.c.b16 %v185, %v184
    %v235 = vpack.c.b16 %v187, %v186
    %v236 = vpack.c.b16 %v189, %v188
    %v237 = vpack.c.b16 %v191, %v190
    %v238 = vpack.c.b16 %v193, %v192
    %v239 = vpack.c.b16 %v195, %v194
    %v240 = vpack.c.b16 %v197, %v196
    %v241 = vpack.c.b16 %v199, %v198
    %v242 = vpack.c.b16 %v201, %v200
    %v243 = vpack.c.b16 %v203, %v202
    %v244 = vpack.c.b16 %v205, %v204
    %v245 = vpack.c.b16 %v207, %v206
    %v246 = vpack.c.b16 %v209, %v208
    %v247 = vpack.c.b16 %v211, %v210
    %v248 = vpack.c.b16 %v213, %v212
    %v249 = vpack.c.b16 %v215, %v214
    %v250 = vpack.c.b16 %v217, %v216
    %v251 = vpack.c.b16 %v219, %v218
    %v256 = vunpack.c.l.b16 %v84
    %v257 = vunpack.c.l.b16 %v85
    %v258 = vunpack.c.l.b16 %v86
    %v259 = vunpack.c.l.b16 %v87
    %v260 = vpack.c.b16 %v257, %v256
    %v261 = vpack.c.b16 %v259, %v258
    %vm264 = vcmask 261120
    %v266 = vsel %vm264, %v220, 0
    %v269 = vsel %vm264, %v221, 0
    %v272 = vsel %vm264, %v222, 0
    %v275 = vsel %vm264, %v223, 0
    %v278 = vsel %vm264, %v224, 0
    %v281 = vsel %vm264, %v225, 0
    %v284 = vsel %vm264, %v226, 0
    %v287 = vsel %vm264, %v227, 0
    %v290 = vsel %vm264, %v228, 0
    %v293 = vsel %vm264, %v229, 0
    %v296 = vsel %vm264, %v230, 0
    %v299 = vsel %vm264, %v231, 0
    %v302 = vsel %vm264, %v232, 0
    %v305 = vsel %vm264, %v233, 0
    %v308 = vsel %vm264, %v234, 0
    %v311 = vsel %vm264, %v235, 0
    %v314 = vsel %vm264, %v236, 0
    %v317 = vsel %vm264, %v237, 0
    %v320 = vsel %vm264, %v238, 0
    %v323 = vsel %vm264, %v239, 0
    %v326 = vsel %vm264, %v240, 0
    %v329 = vsel %vm264, %v241, 0
    %v332 = vsel %vm264, %v242, 0
    %v335 = vsel %vm264, %v243, 0
    %v338 = vsel %vm264, %v244, 0
    %v341 = vsel %vm264, %v245, 0
    %v344 = vsel %vm264, %v246, 0
    %v347 = vsel %vm264, %v247, 0
    %v350 = vsel %vm264, %v248, 0
    %v353 = vsel %vm264, %v249, 0
    %v356 = vsel %vm264, %v250, 0
    %v359 = vsel %vm264, %v251, 0
    %361 = vmatprep.subr.bf16.mxu0 0
    %362 = vmatpush1.bf16.msra.mxu0 %v260
    %363 = vmatprep.subr.bf16.mxu0 0
    %364 = vmatpush1.bf16.msra.mxu0 %v261
    %365 = vmatprep.subr.bf16.mxu0 0
    %366 = vmatpush1.bf16.msra.mxu0 0
    %367 = vmatprep.subr.bf16.mxu0 0
    %368 = vmatpush1.bf16.msra.mxu0 0
    %369 = vmatprep.subr.bf16.mxu0 0
    %370 = vmatpush1.bf16.msra.mxu0 0
    %371 = vmatprep.subr.bf16.mxu0 0
    %372 = vmatpush1.bf16.msra.mxu0 0
    %373 = vmatprep.subr.bf16.mxu0 0
    %374 = vmatpush1.bf16.msra.mxu0 0
    %375 = vmatprep.subr.bf16.mxu0 0
    %376 = vmatpush1.bf16.msra.mxu0 0
    %377 = vmatprep.subr.bf16.mxu0 0
    %378 = vmatpush1.bf16.msra.mxu0 0
    %379 = vmatprep.subr.bf16.mxu0 0
    %380 = vmatpush1.bf16.msra.mxu0 0
    %381 = vmatprep.subr.bf16.mxu0 0
    %382 = vmatpush1.bf16.msra.mxu0 0
    %383 = vmatprep.subr.bf16.mxu0 0
    %384 = vmatpush1.bf16.msra.mxu0 0
    %385 = vmatprep.subr.bf16.mxu0 0
    %386 = vmatpush1.bf16.msra.mxu0 0
    %387 = vmatprep.subr.bf16.mxu0 0
    %388 = vmatpush1.bf16.msra.mxu0 0
    %389 = vmatprep.subr.bf16.mxu0 0
    %390 = vmatpush1.bf16.msra.mxu0 0
    %391 = vmatprep.subr.bf16.mxu0 0
    %392 = vmatpush1.bf16.msra.mxu0 0
    %393 = vmatprep.mubr.bf16.mxu0 0
    %394 = vmatmul.mubr.bf16.gmra.mrb[0].mxu0 %v266
    %v395 = vpop.f32.mrb[0].mxu0
    %v396 = vadd.f32 %v91, %v395
    %v397 = vpop.f32.mrb[0].mxu0
    %v398 = vpop.f32.mrb[0].mxu0
    %v399 = vadd.f32 %v91, %v398
    %v400 = vpop.f32.mrb[0].mxu0
    %401 = vmatprep.mubr.bf16.mxu0 0
    %402 = vmatmul.mubr.bf16.gmra.mrb[0].mxu0 %v269
    %v403 = vpop.f32.mrb[0].mxu0
    %v404 = vadd.f32 %v91, %v403
    %v405 = vpop.f32.mrb[0].mxu0
    %v406 = vpop.f32.mrb[0].mxu0
    %v407 = vadd.f32 %v91, %v406
    %v408 = vpop.f32.mrb[0].mxu0
    %409 = vmatprep.mubr.bf16.mxu0 0
    %410 = vmatmul.mubr.bf16.gmra.mrb[0].mxu0 %v272
    %v411 = vpop.f32.mrb[0].mxu0
    %v412 = vadd.f32 %v91, %v411
    %v413 = vpop.f32.mrb[0].mxu0
    %v414 = vpop.f32.mrb[0].mxu0
    %v415 = vadd.f32 %v91, %v414
    %v416 = vpop.f32.mrb[0].mxu0
    %417 = vmatprep.mubr.bf16.mxu0 0
    %418 = vmatmul.mubr.bf16.gmra.mrb[0].mxu0 %v275
    %v419 = vpop.f32.mrb[0].mxu0
    %v420 = vadd.f32 %v91, %v419
    %v421 = vpop.f32.mrb[0].mxu0
    %v422 = vpop.f32.mrb[0].mxu0
    %v423 = vadd.f32 %v91, %v422
    %v424 = vpop.f32.mrb[0].mxu0
    %425 = vmatprep.mubr.bf16.mxu0 0
    %426 = vmatmul.mubr.bf16.gmra.mrb[0].mxu0 %v278
    %v427 = vpop.f32.mrb[0].mxu0
    %v428 = vadd.f32 %v91, %v427
    %v429 = vpop.f32.mrb[0].mxu0
    %v430 = vpop.f32.mrb[0].mxu0
    %v431 = vadd.f32 %v91, %v430
    %v432 = vpop.f32.mrb[0].mxu0
    %433 = vmatprep.mubr.bf16.mxu0 0
    %434 = vmatmul.mubr.bf16.gmra.mrb[0].mxu0 %v281
    %v435 = vpop.f32.mrb[0].mxu0
    %v436 = vadd.f32 %v91, %v435
    %v437 = vpop.f32.mrb[0].mxu0
    %v438 = vpop.f32.mrb[0].mxu0
    %v439 = vadd.f32 %v91, %v438
    %v440 = vpop.f32.mrb[0].mxu0
    %441 = vmatprep.mubr.bf16.mxu0 0
    %442 = vmatmul.mubr.bf16.gmra.mrb[0].mxu0 %v284
    %v443 = vpop.f32.mrb[0].mxu0
    %v444 = vadd.f32 %v91, %v443
    %v445 = vpop.f32.mrb[0].mxu0
    %v446 = vpop.f32.mrb[0].mxu0
    %v447 = vadd.f32 %v91, %v446
    %v448 = vpop.f32.mrb[0].mxu0
    %449 = vmatprep.mubr.bf16.mxu0 0
    %450 = vmatmul.mubr.bf16.gmra.mrb[0].mxu0 %v287
    %v451 = vpop.f32.mrb[0].mxu0
    %v452 = vadd.f32 %v91, %v451
    %v453 = vpop.f32.mrb[0].mxu0
    %v454 = vpop.f32.mrb[0].mxu0
    %v455 = vadd.f32 %v91, %v454
    %v456 = vpop.f32.mrb[0].mxu0
    %457 = vmatprep.mubr.bf16.mxu0 0
    %458 = vmatmul.mubr.bf16.gmra.mrb[0].mxu0 %v290
    %v459 = vpop.f32.mrb[0].mxu0
    %v460 = vadd.f32 %v91, %v459
    %v461 = vpop.f32.mrb[0].mxu0
    %v462 = vpop.f32.mrb[0].mxu0
    %v463 = vadd.f32 %v91, %v462
    %v464 = vpop.f32.mrb[0].mxu0
    %465 = vmatprep.mubr.bf16.mxu0 0
    %466 = vmatmul.mubr.bf16.gmra.mrb[0].mxu0 %v293
    %v467 = vpop.f32.mrb[0].mxu0
    %v468 = vadd.f32 %v91, %v467
    %v469 = vpop.f32.mrb[0].mxu0
    %v470 = vpop.f32.mrb[0].mxu0
    %v471 = vadd.f32 %v91, %v470
    %v472 = vpop.f32.mrb[0].mxu0
    %473 = vmatprep.mubr.bf16.mxu0 0
    %474 = vmatmul.mubr.bf16.gmra.mrb[0].mxu0 %v296
    %v475 = vpop.f32.mrb[0].mxu0
    %v476 = vadd.f32 %v91, %v475
    %v477 = vpop.f32.mrb[0].mxu0
    %v478 = vpop.f32.mrb[0].mxu0
    %v479 = vadd.f32 %v91, %v478
    %v480 = vpop.f32.mrb[0].mxu0
    %481 = vmatprep.mubr.bf16.mxu0 0
    %482 = vmatmul.mubr.bf16.gmra.mrb[0].mxu0 %v299
    %v483 = vpop.f32.mrb[0].mxu0
    %v484 = vadd.f32 %v91, %v483
    %v485 = vpop.f32.mrb[0].mxu0
    %v486 = vpop.f32.mrb[0].mxu0
    %v487 = vadd.f32 %v91, %v486
    %v488 = vpop.f32.mrb[0].mxu0
    %489 = vmatprep.mubr.bf16.mxu0 0
    %490 = vmatmul.mubr.bf16.gmra.mrb[0].mxu0 %v302
    %v491 = vpop.f32.mrb[0].mxu0
    %v492 = vadd.f32 %v91, %v491
    %v493 = vpop.f32.mrb[0].mxu0
    %v494 = vpop.f32.mrb[0].mxu0
    %v495 = vadd.f32 %v91, %v494
    %v496 = vpop.f32.mrb[0].mxu0
    %497 = vmatprep.mubr.bf16.mxu0 0
    %498 = vmatmul.mubr.bf16.gmra.mrb[0].mxu0 %v305
    %v499 = vpop.f32.mrb[0].mxu0
    %v500 = vadd.f32 %v91, %v499
    %v501 = vpop.f32.mrb[0].mxu0
    %v502 = vpop.f32.mrb[0].mxu0
    %v503 = vadd.f32 %v91, %v502
    %v504 = vpop.f32.mrb[0].mxu0
    %505 = vmatprep.mubr.bf16.mxu0 0
    %506 = vmatmul.mubr.bf16.gmra.mrb[0].mxu0 %v308
    %v507 = vpop.f32.mrb[0].mxu0
    %v508 = vadd.f32 %v91, %v507
    %v509 = vpop.f32.mrb[0].mxu0
    %v510 = vpop.f32.mrb[0].mxu0
    %v511 = vadd.f32 %v91, %v510
    %v512 = vpop.f32.mrb[0].mxu0
    %513 = vmatprep.mubr.bf16.mxu0 0
    %514 = vmatmul.mubr.bf16.gmra.mrb[0].mxu0 %v311
    %v515 = vpop.f32.mrb[0].mxu0
    %v516 = vadd.f32 %v91, %v515
    %v517 = vpop.f32.mrb[0].mxu0
    %v518 = vpop.f32.mrb[0].mxu0
    %v519 = vadd.f32 %v91, %v518
    %v520 = vpop.f32.mrb[0].mxu0
    %521 = vmatprep.mubr.bf16.mxu0 0
    %522 = vmatmul.mubr.bf16.gmra.mrb[0].mxu0 %v314
    %v523 = vpop.f32.mrb[0].mxu0
    %v524 = vadd.f32 %v91, %v523
    %v525 = vpop.f32.mrb[0].mxu0
    %v526 = vpop.f32.mrb[0].mxu0
    %v527 = vadd.f32 %v91, %v526
    %v528 = vpop.f32.mrb[0].mxu0
    %529 = vmatprep.mubr.bf16.mxu0 0
    %530 = vmatmul.mubr.bf16.gmra.mrb[0].mxu0 %v317
    %v531 = vpop.f32.mrb[0].mxu0
    %v532 = vadd.f32 %v91, %v531
    %v533 = vpop.f32.mrb[0].mxu0
    %v534 = vpop.f32.mrb[0].mxu0
    %v535 = vadd.f32 %v91, %v534
    %v536 = vpop.f32.mrb[0].mxu0
    %537 = vmatprep.mubr.bf16.mxu0 0
    %538 = vmatmul.mubr.bf16.gmra.mrb[0].mxu0 %v320
    %v539 = vpop.f32.mrb[0].mxu0
    %v540 = vadd.f32 %v91, %v539
    %v541 = vpop.f32.mrb[0].mxu0
    %v542 = vpop.f32.mrb[0].mxu0
    %v543 = vadd.f32 %v91, %v542
    %v544 = vpop.f32.mrb[0].mxu0
    %545 = vmatprep.mubr.bf16.mxu0 0
    %546 = vmatmul.mubr.bf16.gmra.mrb[0].mxu0 %v323
    %v547 = vpop.f32.mrb[0].mxu0
    %v548 = vadd.f32 %v91, %v547
    %v549 = vpop.f32.mrb[0].mxu0
    %v550 = vpop.f32.mrb[0].mxu0
    %v551 = vadd.f32 %v91, %v550
    %v552 = vpop.f32.mrb[0].mxu0
    %553 = vmatprep.mubr.bf16.mxu0 0
    %554 = vmatmul.mubr.bf16.gmra.mrb[0].mxu0 %v326
    %v555 = vpop.f32.mrb[0].mxu0
    %v556 = vadd.f32 %v91, %v555
    %v557 = vpop.f32.mrb[0].mxu0
    %v558 = vpop.f32.mrb[0].mxu0
    %v559 = vadd.f32 %v91, %v558
    %v560 = vpop.f32.mrb[0].mxu0
    %561 = vmatprep.mubr.bf16.mxu0 0
    %562 = vmatmul.mubr.bf16.gmra.mrb[0].mxu0 %v329
    %v563 = vpop.f32.mrb[0].mxu0
    %v564 = vadd.f32 %v91, %v563
    %v565 = vpop.f32.mrb[0].mxu0
    %v566 = vpop.f32.mrb[0].mxu0
    %v567 = vadd.f32 %v91, %v566
    %v568 = vpop.f32.mrb[0].mxu0
    %569 = vmatprep.mubr.bf16.mxu0 0
    %570 = vmatmul.mubr.bf16.gmra.mrb[0].mxu0 %v332
    %v571 = vpop.f32.mrb[0].mxu0
    %v572 = vadd.f32 %v91, %v571
    %v573 = vpop.f32.mrb[0].mxu0
    %v574 = vpop.f32.mrb[0].mxu0
    %v575 = vadd.f32 %v91, %v574
    %v576 = vpop.f32.mrb[0].mxu0
    %577 = vmatprep.mubr.bf16.mxu0 0
    %578 = vmatmul.mubr.bf16.gmra.mrb[0].mxu0 %v335
    %v579 = vpop.f32.mrb[0].mxu0
    %v580 = vadd.f32 %v91, %v579
    %v581 = vpop.f32.mrb[0].mxu0
    %v582 = vpop.f32.mrb[0].mxu0
    %v583 = vadd.f32 %v91, %v582
    %v584 = vpop.f32.mrb[0].mxu0
    %585 = vmatprep.mubr.bf16.mxu0 0
    %586 = vmatmul.mubr.bf16.gmra.mrb[0].mxu0 %v338
    %v587 = vpop.f32.mrb[0].mxu0
    %v588 = vadd.f32 %v91, %v587
    %v589 = vpop.f32.mrb[0].mxu0
    %v590 = vpop.f32.mrb[0].mxu0
    %v591 = vadd.f32 %v91, %v590
    %v592 = vpop.f32.mrb[0].mxu0
    %593 = vmatprep.mubr.bf16.mxu0 0
    %594 = vmatmul.mubr.bf16.gmra.mrb[0].mxu0 %v341
    %v595 = vpop.f32.mrb[0].mxu0
    %v596 = vadd.f32 %v91, %v595
    %v597 = vpop.f32.mrb[0].mxu0
    %v598 = vpop.f32.mrb[0].mxu0
    %v599 = vadd.f32 %v91, %v598
    %v600 = vpop.f32.mrb[0].mxu0
    %601 = vmatprep.mubr.bf16.mxu0 0
    %602 = vmatmul.mubr.bf16.gmra.mrb[0].mxu0 %v344
    %v603 = vpop.f32.mrb[0].mxu0
    %v604 = vadd.f32 %v91, %v603
    %v605 = vpop.f32.mrb[0].mxu0
    %v606 = vpop.f32.mrb[0].mxu0
    %v607 = vadd.f32 %v91, %v606
    %v608 = vpop.f32.mrb[0].mxu0
    %609 = vmatprep.mubr.bf16.mxu0 0
    %610 = vmatmul.mubr.bf16.gmra.mrb[0].mxu0 %v347
    %v611 = vpop.f32.mrb[0].mxu0
    %v612 = vadd.f32 %v91, %v611
    %v613 = vpop.f32.mrb[0].mxu0
    %v614 = vpop.f32.mrb[0].mxu0
    %v615 = vadd.f32 %v91, %v614
    %v616 = vpop.f32.mrb[0].mxu0
    %617 = vmatprep.mubr.bf16.mxu0 0
    %618 = vmatmul.mubr.bf16.gmra.mrb[0].mxu0 %v350
    %v619 = vpop.f32.mrb[0].mxu0
    %v620 = vadd.f32 %v91, %v619
    %v621 = vpop.f32.mrb[0].mxu0
    %v622 = vpop.f32.mrb[0].mxu0
    %v623 = vadd.f32 %v91, %v622
    %v624 = vpop.f32.mrb[0].mxu0
    %625 = vmatprep.mubr.bf16.mxu0 0
    %626 = vmatmul.mubr.bf16.gmra.mrb[0].mxu0 %v353
    %v627 = vpop.f32.mrb[0].mxu0
    %v628 = vadd.f32 %v91, %v627
    %v629 = vpop.f32.mrb[0].mxu0
    %v630 = vpop.f32.mrb[0].mxu0
    %v631 = vadd.f32 %v91, %v630
    %v632 = vpop.f32.mrb[0].mxu0
    %633 = vmatprep.mubr.bf16.mxu0 0
    %634 = vmatmul.mubr.bf16.gmra.mrb[0].mxu0 %v356
    %v635 = vpop.f32.mrb[0].mxu0
    %v636 = vadd.f32 %v91, %v635
    %v637 = vpop.f32.mrb[0].mxu0
    %v638 = vpop.f32.mrb[0].mxu0
    %v639 = vadd.f32 %v91, %v638
    %v640 = vpop.f32.mrb[0].mxu0
    %641 = vmatprep.mubr.bf16.mxu0 0
    %642 = vmatmul.mubr.bf16.gmra.mrb[0].mxu0 %v359
    %v643 = vpop.f32.mrb[0].mxu0
    %v644 = vadd.f32 %v91, %v643
    %v645 = vpop.f32.mrb[0].mxu0
    %v646 = vpop.f32.mrb[0].mxu0
    %v647 = vadd.f32 %v91, %v646
    %v648 = vpop.f32.mrb[0].mxu0
    %649 = vdwg.mxu0
    %v650 = vmax.f32 %v396, 0.0
    %v651 = vmax.f32 %v399, 0.0
    %v652 = vmax.f32 %v404, 0.0
    %v653 = vmax.f32 %v407, 0.0
    %v654 = vmax.f32 %v412, 0.0
    %v655 = vmax.f32 %v415, 0.0
    %v656 = vmax.f32 %v420, 0.0
    %v657 = vmax.f32 %v423, 0.0
    %v658 = vmax.f32 %v428, 0.0
    %v659 = vmax.f32 %v431, 0.0
    %v660 = vmax.f32 %v436, 0.0
    %v661 = vmax.f32 %v439, 0.0
    %v662 = vmax.f32 %v444, 0.0
    %v663 = vmax.f32 %v447, 0.0
    %v664 = vmax.f32 %v452, 0.0
    %v665 = vmax.f32 %v455, 0.0
    %v666 = vmax.f32 %v460, 0.0
    %v667 = vmax.f32 %v463, 0.0
    %v668 = vmax.f32 %v468, 0.0
    %v669 = vmax.f32 %v471, 0.0
    %v670 = vmax.f32 %v476, 0.0
    %v671 = vmax.f32 %v479, 0.0
    %v672 = vmax.f32 %v484, 0.0
    %v673 = vmax.f32 %v487, 0.0
    %v674 = vmax.f32 %v492, 0.0
    %v675 = vmax.f32 %v495, 0.0
    %v676 = vmax.f32 %v500, 0.0
    %v677 = vmax.f32 %v503, 0.0
    %v678 = vmax.f32 %v508, 0.0
    %v679 = vmax.f32 %v511, 0.0
    %v680 = vmax.f32 %v516, 0.0
    %v681 = vmax.f32 %v519, 0.0
    %v682 = vmax.f32 %v524, 0.0
    %v683 = vmax.f32 %v527, 0.0
    %v684 = vmax.f32 %v532, 0.0
    %v685 = vmax.f32 %v535, 0.0
    %v686 = vmax.f32 %v540, 0.0
    %v687 = vmax.f32 %v543, 0.0
    %v688 = vmax.f32 %v548, 0.0
    %v689 = vmax.f32 %v551, 0.0
    %v690 = vmax.f32 %v556, 0.0
    %v691 = vmax.f32 %v559, 0.0
    %v692 = vmax.f32 %v564, 0.0
    %v693 = vmax.f32 %v567, 0.0
    %v694 = vmax.f32 %v572, 0.0
    %v695 = vmax.f32 %v575, 0.0
    %v696 = vmax.f32 %v580, 0.0
    %v697 = vmax.f32 %v583, 0.0
    %v698 = vmax.f32 %v588, 0.0
    %v699 = vmax.f32 %v591, 0.0
    %v700 = vmax.f32 %v596, 0.0
    %v701 = vmax.f32 %v599, 0.0
    %v702 = vmax.f32 %v604, 0.0
    %v703 = vmax.f32 %v607, 0.0
    %v704 = vmax.f32 %v612, 0.0
    %v705 = vmax.f32 %v615, 0.0
    %v706 = vmax.f32 %v620, 0.0
    %v707 = vmax.f32 %v623, 0.0
    %v708 = vmax.f32 %v628, 0.0
    %v709 = vmax.f32 %v631, 0.0
    %v710 = vmax.f32 %v636, 0.0
    %v711 = vmax.f32 %v639, 0.0
    %v712 = vmax.f32 %v644, 0.0
    %v713 = vmax.f32 %v647, 0.0
    %v714 = vsel %vm264, %v650, 0.0
    %v715 = vsel %vm264, %v651, 0.0
    %v716 = vadd.f32 %v714, %v715
    %v717 = vsel %vm264, %v652, 0.0
    %v718 = vadd.f32 %v716, %v717
    %v719 = vsel %vm264, %v653, 0.0
    %v720 = vadd.f32 %v718, %v719
    %v721 = vsel %vm264, %v654, 0.0
    %v722 = vadd.f32 %v720, %v721
    %v723 = vsel %vm264, %v655, 0.0
    %v724 = vadd.f32 %v722, %v723
    %v725 = vsel %vm264, %v656, 0.0
    %v726 = vadd.f32 %v724, %v725
    %v727 = vsel %vm264, %v657, 0.0
    %v728 = vadd.f32 %v726, %v727
    %v729 = vsel %vm264, %v658, 0.0
    %v730 = vadd.f32 %v728, %v729
    %v731 = vsel %vm264, %v659, 0.0
    %v732 = vadd.f32 %v730, %v731
    %v733 = vsel %vm264, %v660, 0.0
    %v734 = vadd.f32 %v732, %v733
    %v735 = vsel %vm264, %v661, 0.0
    %v736 = vadd.f32 %v734, %v735
    %v737 = vsel %vm264, %v662, 0.0
    %v738 = vadd.f32 %v736, %v737
    %v739 = vsel %vm264, %v663, 0.0
    %v740 = vadd.f32 %v738, %v739
    %v741 = vsel %vm264, %v664, 0.0
    %v742 = vadd.f32 %v740, %v741
    %v743 = vsel %vm264, %v665, 0.0
    %v744 = vadd.f32 %v742, %v743
    %v745 = vsel %vm264, %v666, 0.0
    %v746 = vadd.f32 %v744, %v745
    %v747 = vsel %vm264, %v667, 0.0
    %v748 = vadd.f32 %v746, %v747
    %v749 = vsel %vm264, %v668, 0.0
    %v750 = vadd.f32 %v748, %v749
    %v751 = vsel %vm264, %v669, 0.0
    %v752 = vadd.f32 %v750, %v751
    %v753 = vsel %vm264, %v670, 0.0
    %v754 = vadd.f32 %v752, %v753
    %v755 = vsel %vm264, %v671, 0.0
    %v756 = vadd.f32 %v754, %v755
    %v757 = vsel %vm264, %v672, 0.0
    %v758 = vadd.f32 %v756, %v757
    %v759 = vsel %vm264, %v673, 0.0
    %v760 = vadd.f32 %v758, %v759
    %v761 = vsel %vm264, %v674, 0.0
    %v762 = vadd.f32 %v760, %v761
    %v763 = vsel %vm264, %v675, 0.0
    %v764 = vadd.f32 %v762, %v763
    %v765 = vsel %vm264, %v676, 0.0
    %v766 = vadd.f32 %v764, %v765
    %v767 = vsel %vm264, %v677, 0.0
    %v768 = vadd.f32 %v766, %v767
    %v769 = vsel %vm264, %v678, 0.0
    %v770 = vadd.f32 %v768, %v769
    %v771 = vsel %vm264, %v679, 0.0
    %v772 = vadd.f32 %v770, %v771
    %v773 = vsel %vm264, %v680, 0.0
    %v774 = vadd.f32 %v772, %v773
    %v775 = vsel %vm264, %v681, 0.0
    %v776 = vadd.f32 %v774, %v775
    %v777 = vrot.slane %v776, 4
    %v778 = vadd.f32 %v776, %v777
    %v779 = vrot.slane %v778, 2
    %v780 = vadd.f32 %v778, %v779
    %v781 = vrot.slane %v780, 1
    %v782 = vadd.f32 %v780, %v781
    %v783 = vsel %vm264, %v682, 0.0
    %v784 = vsel %vm264, %v683, 0.0
    %v785 = vadd.f32 %v783, %v784
    %v786 = vsel %vm264, %v684, 0.0
    %v787 = vadd.f32 %v785, %v786
    %v788 = vsel %vm264, %v685, 0.0
    %v789 = vadd.f32 %v787, %v788
    %v790 = vsel %vm264, %v686, 0.0
    %v791 = vadd.f32 %v789, %v790
    %v792 = vsel %vm264, %v687, 0.0
    %v793 = vadd.f32 %v791, %v792
    %v794 = vsel %vm264, %v688, 0.0
    %v795 = vadd.f32 %v793, %v794
    %v796 = vsel %vm264, %v689, 0.0
    %v797 = vadd.f32 %v795, %v796
    %v798 = vsel %vm264, %v690, 0.0
    %v799 = vadd.f32 %v797, %v798
    %v800 = vsel %vm264, %v691, 0.0
    %v801 = vadd.f32 %v799, %v800
    %v802 = vsel %vm264, %v692, 0.0
    %v803 = vadd.f32 %v801, %v802
    %v804 = vsel %vm264, %v693, 0.0
    %v805 = vadd.f32 %v803, %v804
    %v806 = vsel %vm264, %v694, 0.0
    %v807 = vadd.f32 %v805, %v806
    %v808 = vsel %vm264, %v695, 0.0
    %v809 = vadd.f32 %v807, %v808
    %v810 = vsel %vm264, %v696, 0.0
    %v811 = vadd.f32 %v809, %v810
    %v812 = vsel %vm264, %v697, 0.0
    %v813 = vadd.f32 %v811, %v812
    %v814 = vsel %vm264, %v698, 0.0
    %v815 = vadd.f32 %v813, %v814
    %v816 = vsel %vm264, %v699, 0.0
    %v817 = vadd.f32 %v815, %v816
    %v818 = vsel %vm264, %v700, 0.0
    %v819 = vadd.f32 %v817, %v818
    %v820 = vsel %vm264, %v701, 0.0
    %v821 = vadd.f32 %v819, %v820
    %v822 = vsel %vm264, %v702, 0.0
    %v823 = vadd.f32 %v821, %v822
    %v824 = vsel %vm264, %v703, 0.0
    %v825 = vadd.f32 %v823, %v824
    %v826 = vsel %vm264, %v704, 0.0
    %v827 = vadd.f32 %v825, %v826
    %v828 = vsel %vm264, %v705, 0.0
    %v829 = vadd.f32 %v827, %v828
    %v830 = vsel %vm264, %v706, 0.0
    %v831 = vadd.f32 %v829, %v830
    %v832 = vsel %vm264, %v707, 0.0
    %v833 = vadd.f32 %v831, %v832
    %v834 = vsel %vm264, %v708, 0.0
    %v835 = vadd.f32 %v833, %v834
    %v836 = vsel %vm264, %v709, 0.0
    %v837 = vadd.f32 %v835, %v836
    %v838 = vsel %vm264, %v710, 0.0
    %v839 = vadd.f32 %v837, %v838
    %v840 = vsel %vm264, %v711, 0.0
    %v841 = vadd.f32 %v839, %v840
    %v842 = vsel %vm264, %v712, 0.0
    %v843 = vadd.f32 %v841, %v842
    %v844 = vsel %vm264, %v713, 0.0
    %v845 = vadd.f32 %v843, %v844
    %v846 = vrot.slane %v845, 4
    %v847 = vadd.f32 %v845, %v846
    %v848 = vrot.slane %v847, 2
    %v849 = vadd.f32 %v847, %v848
    %v850 = vrot.slane %v849, 1
    %v851 = vadd.f32 %v849, %v850
    %vm852 = vcmask 1040384
    %v853 = vsel %vm852, %v782, %v851
    %v854 = vmul.f32 %v853, 0.00390625
    %v855 = vpack.c.bf16 %v854, %v854
    %v856 = vld [vmem:[%s2] sm:$0xf]
    %v857 = vld [vmem:[%s2 + $0x4] sm:$0xf]
    %v858 = vld [vmem:[%s2 + $0x8] sm:$0xf]
    %v859 = vld [vmem:[%s2 + $0xc] sm:$0xf]
    %v860 = vlaneseq
    %v861 = vshrl.u32 %v860, 7
    %v862 = vsub.s32 1, %v861
    %v863 = vrot.slane %v19, %v862
    %v868 = vunpack.c.l.b16 %v856
    %v869 = vunpack.c.l.b16 %v857
    %v870 = vunpack.c.l.b16 %v858
    %v871 = vunpack.c.l.b16 %v859
    %v872 = vpack.c.b16 %v869, %v868
    %v873 = vpack.c.b16 %v871, %v870
    %v877 = vsel %vm264, %v855, 0
    %879 = vmatprep.subr.bf16.mxu0 0
    %880 = vmatpush1.bf16.msra.mxu0 %v872
    %881 = vmatprep.subr.bf16.mxu0 0
    %882 = vmatpush1.bf16.msra.mxu0 %v873
    %883 = vmatprep.subr.bf16.mxu0 0
    %884 = vmatpush1.bf16.msra.mxu0 0
    %885 = vmatprep.subr.bf16.mxu0 0
    %886 = vmatpush1.bf16.msra.mxu0 0
    %887 = vmatprep.subr.bf16.mxu0 0
    %888 = vmatpush1.bf16.msra.mxu0 0
    %889 = vmatprep.subr.bf16.mxu0 0
    %890 = vmatpush1.bf16.msra.mxu0 0
    %891 = vmatprep.subr.bf16.mxu0 0
    %892 = vmatpush1.bf16.msra.mxu0 0
    %893 = vmatprep.subr.bf16.mxu0 0
    %894 = vmatpush1.bf16.msra.mxu0 0
    %895 = vmatprep.subr.bf16.mxu0 0
    %896 = vmatpush1.bf16.msra.mxu0 0
    %897 = vmatprep.subr.bf16.mxu0 0
    %898 = vmatpush1.bf16.msra.mxu0 0
    %899 = vmatprep.subr.bf16.mxu0 0
    %900 = vmatpush1.bf16.msra.mxu0 0
    %901 = vmatprep.subr.bf16.mxu0 0
    %902 = vmatpush1.bf16.msra.mxu0 0
    %903 = vmatprep.subr.bf16.mxu0 0
    %904 = vmatpush1.bf16.msra.mxu0 0
    %905 = vmatprep.subr.bf16.mxu0 0
    %906 = vmatpush1.bf16.msra.mxu0 0
    %907 = vmatprep.subr.bf16.mxu0 0
    %908 = vmatpush1.bf16.msra.mxu0 0
    %909 = vmatprep.subr.bf16.mxu0 0
    %910 = vmatpush1.bf16.msra.mxu0 0
    %911 = vmatprep.mubr.bf16.mxu0 0
    %912 = vmatmul.mubr.bf16.gmra.mrb[0].mxu0 %v877
    %v913 = vpop.f32.mrb[0].mxu0
    %v914 = vadd.f32 %v863, %v913
    %v915 = vpop.f32.mrb[0].mxu0
    %v916 = vpop.f32.mrb[0].mxu0
    %v917 = vpop.f32.mrb[0].mxu0
    %918 = vdwg.mxu0
    %vm919 = vcmask 123904
    %v920 = vsel %vm919, %v914, 0.0
    %v921 = vrot.slane %v920, 4
    %v922 = vadd.f32 %v920, %v921
    %v923 = vrot.slane %v922, 2
    %v924 = vadd.f32 %v922, %v923
    %v925 = vrot.slane %v924, 1
    %v926 = vadd.f32 %v924, %v925
    %v927 = vrcp.pop 2.0
    %v928 = vmul.f32 %v926, %v927
    %v929 = vsub.f32 %v914, %v928
    %v930 = vmul.f32 %v929, %v929
    %v931 = vsel %vm919, %v930, 0.0
    %v932 = vrot.slane %v931, 4
    %v933 = vadd.f32 %v931, %v932
    %v934 = vrot.slane %v933, 2
    %v935 = vadd.f32 %v933, %v934
    %v936 = vrot.slane %v935, 1
    %v937 = vadd.f32 %v935, %v936
    %v938 = vmul.f32 %v937, %v927
    %v939 = vlaneseq
    %v940 = vshrl.u32 %v939, 7
    %v941 = vsub.s32 2, %v940
    %v942 = vrot.slane %v19, %v941
    %v943 = vmul.f32 %v942, %v929
    %v944 = vadd.f32 %v938, 1e-05
    %v945 = vrsqrt.pop %v944
    %v946 = vmul.f32 %v943, %v945
    %v947 = vlaneseq
    %v948 = vshrl.u32 %v947, 7
    %v949 = vsub.s32 3, %v948
    %v950 = vrot.slane %v19, %v949
    %v951 = vadd.f32 %v946, %v950
    %952 = vst.msk [vmem:[#allocation2] sm:$0x3] %vm919, %v951
    // Predicated region
    $region18: #{encoder_cnn_forward.1} parent=1 // pred_check
      _
    $region19: #{encoder_cnn_forward.1} parent=1 // pred_check_branch
      %954 = sbr.rel (0) target = $region21
    $region20: #{encoder_cnn_forward.1} parent=1 // pred_region
      %s956 = ssub.s32 32, 32
      %957 = vsyncadd [#allocation3], %s956
      %s959 = sshll.u32 [#allocation2], 4
      %s960 = int_to_ptr.vmem [resolvable:$true] %s959
      %962 = dma.vmem_to_hbm [thread:$0]  %s960, 32, %s4, [#allocation3]
    $region21: #{encoder_cnn_forward.1} parent=1 // pred_fallthru
      _
    // Predicated region
    $region22: #{encoder_cnn_forward.1} parent=1 // pred_check
      _
    $region23: #{encoder_cnn_forward.1} parent=1 // pred_check_branch
      %964 = sbr.rel (0) target = $region25
    $region24: #{encoder_cnn_forward.1} parent=1 // pred_region
      %965 = dma.done [#allocation3], 32
    $region25: #{encoder_cnn_forward.1} parent=1 // pred_fallthru
      _
    %966 = vsyncpa [#allocation3], 1

</llo_original>
